<compile_context>
chip_gen: v6e
topology: v6e:2x2x1
jax: 0.10.0
libtpu: 0.0.40
codegen_flags: <defaults>
</compile_context>

<pallas_src>
from functools import partial

import jax
import jax.numpy as jnp
from jax.experimental import pallas as pl
from jax.experimental.pallas import tpu as pltpu


def _round_up(x, m):
    return ((x + m - 1) // m) * m


def _patch_embed_kernel(p_ref, w_ref, b_ref, o_ref):
    # (TM, Kp) @ (Kp, Np) on the MXU with f32 accumulation; the bias add rides
    # on the VPU under the MXU-dominated bundle; cast happens on the store path.
    acc = jnp.dot(p_ref[...], w_ref[...], preferred_element_type=jnp.float32)
    o_ref[...] = (acc + b_ref[...]).astype(o_ref.dtype)


def _choose_tm(m_rows, kp, np_, in_bytes, out_bytes, budget=20 * 1024 * 1024):
    """Largest M tile (multiple of 8, <= 1024) whose working set
    (2 double-buffered input blocks + resident weight + bias + 2 output blocks)
    fits a conservative VMEM budget that is safe on v5e/v6e/v7x."""
    per_row = 2 * kp * in_bytes + 2 * np_ * out_bytes
    fixed = kp * np_ * in_bytes + 2 * np_ * 4
    avail = max(budget - fixed, 8 * per_row)
    tm = min(1024, avail // per_row)
    tm = max(8, (tm // 8) * 8)
    tm = min(tm, _round_up(m_rows, 8))
    return int(tm)


@partial(jax.jit, static_argnames=("patch_size", "compute_dtype"))
def _patch_embed_tokens(x, weight, bias, patch_size, compute_dtype=None):
    B, C, H, W = x.shape
    ph, pw = patch_size
    Hp, Wp = H // ph, W // pw
    embed_dim = weight.shape[0]

    # --- unfold NCHW -> (M, K) patch matrix.  Kept inside this jit so XLA can
    # fuse it with the padding / producers rather than a standalone transpose.
    # TODO(synk): move the unfold fully in-kernel (grid over (B, Hp), per-row
    # pl.ds slices on raw NCHW x) to eliminate the extra HBM pass entirely.
    xp = x.reshape(B, C, Hp, ph, Wp, pw)
    xp = jnp.transpose(xp, (0, 2, 4, 1, 3, 5))
    patches = xp.reshape(B * Hp * Wp, C * ph * pw)

    # Conv weight (E, C, ph, pw) -> (K, E); k flattens (c, u, v) like PyTorch.
    w_mat = weight.reshape(embed_dim, C * ph * pw).T
    b_mat = bias.reshape(1, embed_dim).astype(jnp.float32)

    M, K = patches.shape
    N = embed_dim
    out_dtype = x.dtype

    in_dtype = compute_dtype if compute_dtype is not None else patches.dtype
    patches = patches.astype(in_dtype)
    w_mat = w_mat.astype(in_dtype)

    # Lane-dense K / N, tile-aligned M.
    Kp = _round_up(K, 128)
    Np = _round_up(N, 128)
    in_bytes = jnp.dtype(in_dtype).itemsize
    out_bytes = jnp.dtype(out_dtype).itemsize
    TM = _choose_tm(M, Kp, Np, in_bytes, out_bytes)
    Mp = _round_up(M, TM)

    patches = jnp.pad(patches, ((0, Mp - M), (0, Kp - K)))
    w_mat = jnp.pad(w_mat, ((0, Kp - K), (0, Np - N)))
    b_mat = jnp.pad(b_mat, ((0, 0), (0, Np - N)))

    cost = pl.CostEstimate(
        flops=2 * Mp * Kp * Np,
        transcendentals=0,
        bytes_accessed=(Mp * Kp * in_bytes + Kp * Np * in_bytes
                        + Np * 4 + Mp * Np * out_bytes),
    )

    out = pl.pallas_call(
        _patch_embed_kernel,
        out_shape=jax.ShapeDtypeStruct((Mp, Np), out_dtype),
        grid=(Mp // TM,),
        in_specs=[
            pl.BlockSpec((TM, Kp), lambda i: (i, 0)),   # patch rows: streamed
            pl.BlockSpec((Kp, Np), lambda i: (0, 0)),   # weight: resident
            pl.BlockSpec((1, Np), lambda i: (0, 0)),    # bias: resident
        ],
        out_specs=pl.BlockSpec((TM, Np), lambda i: (i, 0)),
        compiler_params=pltpu.CompilerParams(
            dimension_semantics=("parallel",),          # shard M over TCs (v7x)
            vmem_limit_bytes=32 * 1024 * 1024,
        ),
        cost_estimate=cost,
    )(patches, w_mat, b_mat)

    tokens = out[:M, :N].reshape(B, Hp * Wp, embed_dim)
    return tokens


def patch_embed_forward(x, weight, bias, patch_size, compute_dtype=None):
    """Mirrors PatchEmbed.forward.

    x      : (B, C, H, W) float32, NCHW like the PyTorch module
    weight : (embed_dim, C, ph, pw)  -- nn.Conv2d weight
    bias   : (embed_dim,)            -- nn.Conv2d bias
    compute_dtype: optional dtype (e.g. jnp.bfloat16) for the MXU inputs;
                   accumulation stays f32, output keeps x.dtype.
    returns (tokens, (Hp, Wp)) with tokens of shape (B, Hp*Wp, embed_dim)
    """
    B, C, H, W = x.shape
    ph, pw = patch_size
    Hp, Wp = H // ph, W // pw
    tokens = _patch_embed_tokens(x, weight, bias, tuple(patch_size),
                                 compute_dtype=compute_dtype)
    return tokens, (Hp, Wp)


def _reference_forward(x, weight, bias, patch_size):
    """Plain-JAX reference (equivalent to the PyTorch Conv2d path)."""
    out = jax.lax.conv_general_dilated(
        x, weight,
        window_strides=patch_size,
        padding="VALID",
        dimension_numbers=("NCHW", "OIHW", "NCHW"),
    ) + bias[None, :, None, None]
    B, E, Hp, Wp = out.shape
    tokens = out.reshape(B, E, Hp * Wp).transpose(0, 2, 1)
    return tokens, (Hp, Wp)


if __name__ == "__main__":
    # Small shapes consistent with the module: img_size=16, patch_size=4,
    # in_chans=4, embed_dim=32  ->  Hp=Wp=4, num_patches=16.
    B, C, H, W = 2, 4, 16, 16
    patch_size = (4, 4)
    embed_dim = 32

    key = jax.random.PRNGKey(0)
    kx, kw, kb = jax.random.split(key, 3)
    x = jax.random.normal(kx, (B, C, H, W), dtype=jnp.float32)
    weight = (jax.random.normal(kw, (embed_dim, C, *patch_size), dtype=jnp.float32)
              * 0.02)
    bias = jax.random.normal(kb, (embed_dim,), dtype=jnp.float32) * 0.02

    ref_tokens, (rHp, rWp) = _reference_forward(x, weight, bias, patch_size)

    # f32 path: tight tolerance against the conv reference.
    tokens, (Hp, Wp) = patch_embed_forward(x, weight, bias, patch_size)
    tokens = jax.block_until_ready(tokens)
    assert tokens.shape == (B, Hp * Wp, embed_dim)
    assert (Hp, Wp) == (rHp, rWp)
    assert jnp.allclose(tokens, ref_tokens, atol=1e-4, rtol=1e-4)

    # bf16-input path (MXU fast path, half the HBM traffic): looser tolerance.
    tokens_bf16, _ = patch_embed_forward(x, weight, bias, patch_size,
                                         compute_dtype=jnp.bfloat16)
    tokens_bf16 = jax.block_until_ready(tokens_bf16)
    assert jnp.allclose(tokens_bf16, ref_tokens, atol=2e-2, rtol=2e-2)

    print("KERNEL_OK")
</pallas_src>

<mosaic_0001>
module attributes {stable_mosaic.version = 11 : i64} {
  func.func @_patch_embed_kernel(%arg0: i32, %arg1: memref<32x128xf32, #tpu.memory_space<vmem>>, %arg2: memref<128x128xf32, #tpu.memory_space<vmem>>, %arg3: memref<1x128xf32, #tpu.memory_space<vmem>>, %arg4: memref<32x128xf32, #tpu.memory_space<vmem>>) attributes {dimension_semantics = [#tpu.dimension_semantics<parallel>], iteration_bounds = array<i64: 1>, scalar_prefetch = 0 : i64, scratch_operands = 0 : i64, tpu.core_type = #tpu.core_type<tc>, window_params = [{transform_indices = @transform_0, window_bounds = array<i64: 32, 128>}, {pipeline_mode = #tpu.pipeline_mode<synchronous>, transform_indices = @transform_1, window_bounds = array<i64: 128, 128>}, {pipeline_mode = #tpu.pipeline_mode<synchronous>, transform_indices = @transform_2, window_bounds = array<i64: 1, 128>}, {transform_indices = @transform_3, window_bounds = array<i64: 32, 128>}]} {
    %c0 = arith.constant 0 : index
    %c0_0 = arith.constant 0 : index
    %0 = vector.load %arg1[%c0, %c0_0] : memref<32x128xf32, #tpu.memory_space<vmem>>, vector<32x128xf32>
    %c0_1 = arith.constant 0 : index
    %c0_2 = arith.constant 0 : index
    %1 = vector.load %arg2[%c0_1, %c0_2] : memref<128x128xf32, #tpu.memory_space<vmem>>, vector<128x128xf32>
    %cst = arith.constant dense<0.000000e+00> : vector<32x128xf32>
    %2 = tpu.matmul %0, %1, %cst {dimension_numbers = #tpu.dot_dimension_numbers<[1], [0], [0], [1], [0, 0, 1, 1], [], []>} : vector<32x128xf32>, vector<128x128xf32>, vector<32x128xf32> -> vector<32x128xf32>
    %c0_3 = arith.constant 0 : index
    %c0_4 = arith.constant 0 : index
    %3 = vector.load %arg3[%c0_3, %c0_4] : memref<1x128xf32, #tpu.memory_space<vmem>>, vector<1x128xf32>
    %4 = vector.broadcast %3 : vector<1x128xf32> to vector<32x128xf32>
    %5 = arith.addf %2, %4 : vector<32x128xf32>
    %c0_5 = arith.constant 0 : index
    %c0_6 = arith.constant 0 : index
    %6 = vector.load %arg4[%c0_5, %c0_6] : memref<32x128xf32, #tpu.memory_space<vmem>>, vector<32x128xf32>
    tpu.vector_store %arg4[%c0_5, %c0_6], %5 {strides = array<i32>} : memref<32x128xf32, #tpu.memory_space<vmem>>, vector<32x128xf32>,
    return
  }
  func.func @transform_0(%arg0: i32) -> (i32, i32) {
    %c0_i32 = arith.constant 0 : i32
    %c0_i32_0 = arith.constant 0 : i32
    return %arg0, %c0_i32 : i32, i32
  }
  func.func @transform_1(%arg0: i32) -> (i32, i32) {
    %c0_i32 = arith.constant 0 : i32
    %c0_i32_0 = arith.constant 0 : i32
    %c0_i32_1 = arith.constant 0 : i32
    return %c0_i32, %c0_i32_0 : i32, i32
  }
  func.func @transform_2(%arg0: i32) -> (i32, i32) {
    %c0_i32 = arith.constant 0 : i32
    %c0_i32_0 = arith.constant 0 : i32
    %c0_i32_1 = arith.constant 0 : i32
    return %c0_i32, %c0_i32_0 : i32, i32
  }
  func.func @transform_3(%arg0: i32) -> (i32, i32) {
    %c0_i32 = arith.constant 0 : i32
    %c0_i32_0 = arith.constant 0 : i32
    return %arg0, %c0_i32 : i32, i32
  }
}

</mosaic_0001>

<llo_original>
// kernel: _patch_embed_tokens.1
$region0: #{_patch_embed_tokens.1}
  #allocation0 [shape = 'u32[]', space=smem, size = 0x4, offset = 0x4, fixed_abs, tag = 'smem constant byte address 0x4 - core index']
  #allocation1 [shape = 'u32[144,128]{1,0:T(1,128)}', space=vmem, size = 0x12000, scoped, tag = 'internal scratch']
  %s0 = inlined_call_operand.vmem [shape: f32[32,128], index: 0, kind: input, shape index: {}]
  %s1 = inlined_call_operand.vmem [shape: f32[128,128], index: 1, kind: input, shape index: {}]
  %s2 = inlined_call_operand.vmem [shape: f32[1,128], index: 2, kind: input, shape index: {}]
  %s3 = inlined_call_operand.hbm [shape: f32[32,128], index: 3, kind: output, shape index: {}]
  %s4 = sld [smem:[#allocation0]]
  $region22: #{_patch_embed_tokens.1} parent=0
    _
  %s6 = ssub.s32 1, %s4
  %s7 = scalar_select 0, %s6, %s4
  $region1: #{_patch_embed_tokens.1} parent=0
    #allocation2 [shape = 'u8[16384]{0}', space=vmem, size = 0x4000, scoped, tag = 'output window, operand 0, single buffered']
    #allocation3 [shape = 's32[1]{0}', space=sflag, size = 0x4, scoped, tag = 'scoped memory for _patch_embed_tokens.1']
    %8 = vsyncpa [#allocation3], 0
    // Predicated region
    $region2: #{_patch_embed_tokens.1} parent=1 // pred_check
      _
    $region3: #{_patch_embed_tokens.1} parent=1 // pred_check_branch
      %10 = sbr.rel (0) target = $region5
    $region4: #{_patch_embed_tokens.1} parent=1 // pred_region
      _
    $region5: #{_patch_embed_tokens.1} parent=1 // pred_fallthru
      _
    // Predicated region
    $region6: #{_patch_embed_tokens.1} parent=1 // pred_check
      _
    $region7: #{_patch_embed_tokens.1} parent=1 // pred_check_branch
      %12 = sbr.rel (0) target = $region9
    $region8: #{_patch_embed_tokens.1} parent=1 // pred_region
      _
    $region9: #{_patch_embed_tokens.1} parent=1 // pred_fallthru
      _
    // Predicated region
    $region10: #{_patch_embed_tokens.1} parent=1 // pred_check
      _
    $region11: #{_patch_embed_tokens.1} parent=1 // pred_check_branch
      %14 = sbr.rel (0) target = $region13
    $region12: #{_patch_embed_tokens.1} parent=1 // pred_region
      _
    $region13: #{_patch_embed_tokens.1} parent=1 // pred_fallthru
      _
    %v15 = vld [vmem:[%s0] sm:$0xff]
    %v16 = vld [vmem:[%s0 + $0x8] sm:$0xff]
    %v17 = vld [vmem:[%s0 + $0x10] sm:$0xff]
    %v18 = vld [vmem:[%s0 + $0x18] sm:$0xff]
    %v19 = vld [vmem:[%s1] sm:$0xff]
    %v20 = vld [vmem:[%s1 + $0x8] sm:$0xff]
    %v21 = vld [vmem:[%s1 + $0x10] sm:$0xff]
    %v22 = vld [vmem:[%s1 + $0x18] sm:$0xff]
    %v23 = vld [vmem:[%s1 + $0x20] sm:$0xff]
    %v24 = vld [vmem:[%s1 + $0x28] sm:$0xff]
    %v25 = vld [vmem:[%s1 + $0x30] sm:$0xff]
    %v26 = vld [vmem:[%s1 + $0x38] sm:$0xff]
    %v27 = vld [vmem:[%s1 + $0x40] sm:$0xff]
    %v28 = vld [vmem:[%s1 + $0x48] sm:$0xff]
    %v29 = vld [vmem:[%s1 + $0x50] sm:$0xff]
    %v30 = vld [vmem:[%s1 + $0x58] sm:$0xff]
    %v31 = vld [vmem:[%s1 + $0x60] sm:$0xff]
    %v32 = vld [vmem:[%s1 + $0x68] sm:$0xff]
    %v33 = vld [vmem:[%s1 + $0x70] sm:$0xff]
    %v34 = vld [vmem:[%s1 + $0x78] sm:$0xff]
    %v35 = vld [vmem:[%s2] sm:$0x1]
    %v37 = vlaneseq
    %v38 = vshrl.u32 %v37, 7
    %v39 = vsub.s32 0, %v38
    %v40 = vrot.slane %v35, %v39
    %42 = vmatprep.subr.mxu0 0.0
    %43 = vmatpush1.msra.mxu0 %v34
    %44 = vmatprep.subr.mxu0 0.0
    %45 = vmatpush1.msra.mxu0 %v33
    %46 = vmatprep.subr.mxu0 0.0
    %47 = vmatpush1.msra.mxu0 %v32
    %48 = vmatprep.subr.mxu0 0.0
    %49 = vmatpush1.msra.mxu0 %v31
    %50 = vmatprep.subr.mxu0 0.0
    %51 = vmatpush1.msra.mxu0 %v30
    %52 = vmatprep.subr.mxu0 0.0
    %53 = vmatpush1.msra.mxu0 %v29
    %54 = vmatprep.subr.mxu0 0.0
    %55 = vmatpush1.msra.mxu0 %v28
    %56 = vmatprep.subr.mxu0 0.0
    %57 = vmatpush1.msra.mxu0 %v27
    %58 = vmatprep.subr.mxu0 0.0
    %59 = vmatpush1.msra.mxu0 %v26
    %60 = vmatprep.subr.mxu0 0.0
    %61 = vmatpush1.msra.mxu0 %v25
    %62 = vmatprep.subr.mxu0 0.0
    %63 = vmatpush1.msra.mxu0 %v24
    %64 = vmatprep.subr.mxu0 0.0
    %65 = vmatpush1.msra.mxu0 %v23
    %66 = vmatprep.subr.mxu0 0.0
    %67 = vmatpush1.msra.mxu0 %v22
    %68 = vmatprep.subr.mxu0 0.0
    %69 = vmatpush1.msra.mxu0 %v21
    %70 = vmatprep.subr.mxu0 0.0
    %71 = vmatpush1.msra.mxu0 %v20
    %72 = vmatprep.subr.mxu0 0.0
    %73 = vmatpush1.msra.mxu0 %v19
    %74 = vmatprep.subr.mxu0 0.0
    %75 = vmatpush2.msra.mxu0 0.0
    %76 = vmatprep.subr.mxu0 0.0
    %77 = vmatpush2.msra.mxu0 0.0
    %78 = vmatprep.subr.mxu0 0.0
    %79 = vmatpush2.msra.mxu0 0.0
    %80 = vmatprep.subr.mxu0 0.0
    %81 = vmatpush2.msra.mxu0 0.0
    %82 = vmatprep.subr.mxu0 0.0
    %83 = vmatpush2.msra.mxu0 0.0
    %84 = vmatprep.subr.mxu0 0.0
    %85 = vmatpush2.msra.mxu0 0.0
    %86 = vmatprep.subr.mxu0 0.0
    %87 = vmatpush2.msra.mxu0 0.0
    %88 = vmatprep.subr.mxu0 0.0
    %89 = vmatpush2.msra.mxu0 0.0
    %90 = vmatprep.subr.mxu0 0.0
    %91 = vmatpush2.msra.mxu0 0.0
    %92 = vmatprep.subr.mxu0 0.0
    %93 = vmatpush2.msra.mxu0 0.0
    %94 = vmatprep.subr.mxu0 0.0
    %95 = vmatpush2.msra.mxu0 0.0
    %96 = vmatprep.subr.mxu0 0.0
    %97 = vmatpush2.msra.mxu0 0.0
    %98 = vmatprep.subr.mxu0 0.0
    %99 = vmatpush2.msra.mxu0 0.0
    %100 = vmatprep.subr.mxu0 0.0
    %101 = vmatpush2.msra.mxu0 0.0
    %102 = vmatprep.subr.mxu0 0.0
    %103 = vmatpush2.msra.mxu0 0.0
    %104 = vmatprep.subr.mxu0 0.0
    %105 = vmatpush2.msra.mxu0 0.0
    %106 = vmatprep.mubr.f32.mxu0 0.0
    %107 = vmatmul.mubr.f32.gmra.mxu0 %v15
    %v108 = vpop.f32.mrf.mxu0
    %v109 = vadd.f32 %v40, %v108
    %v110 = vpop.f32.mrf.mxu0
    %111 = vmatprep.mubr.f32.mxu0 0.0
    %112 = vmatmul.mubr.f32.gmra.mxu0 %v16
    %v113 = vpop.f32.mrf.mxu0
    %v114 = vadd.f32 %v40, %v113
    %v115 = vpop.f32.mrf.mxu0
    %116 = vmatprep.mubr.f32.mxu0 0.0
    %117 = vmatmul.mubr.f32.gmra.mxu0 %v17
    %v118 = vpop.f32.mrf.mxu0
    %v119 = vadd.f32 %v40, %v118
    %v120 = vpop.f32.mrf.mxu0
    %121 = vmatprep.mubr.f32.mxu0 0.0
    %122 = vmatmul.mubr.f32.gmra.mxu0 %v18
    %v123 = vpop.f32.mrf.mxu0
    %v124 = vadd.f32 %v40, %v123
    %v125 = vpop.f32.mrf.mxu0
    %126 = vdwg.mxu0
    %127 = vst [vmem:[#allocation2] sm:$0xff] %v109
    %128 = vst [vmem:[#allocation2 + $0x8] sm:$0xff] %v114
    %129 = vst [vmem:[#allocation2 + $0x10] sm:$0xff] %v119
    %130 = vst [vmem:[#allocation2 + $0x18] sm:$0xff] %v124
    // Predicated region
    $region14: #{_patch_embed_tokens.1} parent=1 // pred_check
      _
    $region15: #{_patch_embed_tokens.1} parent=1 // pred_check_branch
      %132 = sbr.rel (0) target = $region17
    $region16: #{_patch_embed_tokens.1} parent=1 // pred_region
      %s134 = ssub.s32 512, 512
      %135 = vsyncadd [#allocation3], %s134
      %s136 = sshll.u32 [#allocation2], 4
      %s137 = int_to_ptr.vmem [resolvable:$true] %s136
      %142 = dma.vmem_to_hbm [thread:$0]  %s137, 512, %s3, [#allocation3], 128, 128, 8
    $region17: #{_patch_embed_tokens.1} parent=1 // pred_fallthru
      _
    // Predicated region
    $region18: #{_patch_embed_tokens.1} parent=1 // pred_check
      _
    $region19: #{_patch_embed_tokens.1} parent=1 // pred_check_branch
      %144 = sbr.rel (0) target = $region21
    $region20: #{_patch_embed_tokens.1} parent=1 // pred_region
      %145 = dma.done [#allocation3], 512
    $region21: #{_patch_embed_tokens.1} parent=1 // pred_fallthru
      _
    %146 = vsyncpa [#allocation3], 1

</llo_original>
